<compile_context>
chip_gen: v7x
topology: tpu7x:2x2x1
jax: 0.10.0
libtpu: 0.0.40
codegen_flags: <defaults>
</compile_context>

<pallas_src>
import jax
import jax.numpy as jnp
from jax import lax
from jax.experimental import pallas as pl
from jax.experimental.pallas import tpu as pltpu

BN_EPS = 1e-5
LEAK = 0.1
LANE = 128                 # channel padding granularity (lane width)
TM_MAX = 512               # rows per M tile: safe for v5e/v6e/v7x VMEM budgets
TK_MAX = 2048              # max K-tile width when the weight can't stay resident
RESIDENT_W_BYTES = 12 * 2 ** 20   # keep whole weight in VMEM below this size


def _round_up(x, m):
    return ((x + m - 1) // m) * m


def _pick_tm(M):
    if M > TM_MAX:
        return TM_MAX
    if M >= 256:                       # >=2 M tiles -> both v7x TensorCores busy
        return _round_up(-(-M // 2), 8)
    return M


def _pick_tk(K, cout_p):
    """K-tile width.  Whole K if the bf16 weight fits the resident budget
    (then its block index never changes and it is DMA'd exactly once);
    otherwise the largest 256-multiple divisor <= TK_MAX (v6e/v7x MXU is
    2x256x256), falling back to 128-multiples."""
    if K % LANE != 0:                  # only the 3-channel stem conv (K = 27)
        return K
    if K * cout_p * 2 <= RESIDENT_W_BYTES:
        return K
    best = LANE
    for cand in range(2 * LANE, min(K, TK_MAX) + 1, 2 * LANE):
        if K % cand == 0:
            best = cand
    if best == LANE:
        for cand in range(LANE, min(K, TK_MAX) + 1, LANE):
            if K % cand == 0:
                best = cand
    return best


# ----------------------------------------------------------------------------
# Pass-2 kernels: BN affine + LeakyReLU (+ residual), tiled over M.
# z / residual / output are bf16; the affine + activation math runs in f32.
# ----------------------------------------------------------------------------
def _bn_lrelu_kernel(z_ref, s_ref, b_ref, o_ref):
    y = z_ref[...].astype(jnp.float32) * s_ref[...] + b_ref[...]
    o_ref[...] = jnp.where(y >= 0.0, y, LEAK * y).astype(o_ref.dtype)


def _bn_lrelu_res_kernel(z_ref, s_ref, b_ref, r_ref, o_ref):
    y = z_ref[...].astype(jnp.float32) * s_ref[...] + b_ref[...]
    a = jnp.where(y >= 0.0, y, LEAK * y)
    o_ref[...] = (r_ref[...].astype(jnp.float32) + a).astype(o_ref.dtype)


# ----------------------------------------------------------------------------
# Head kernel: global average pool + Linear (small, latency-bound tail).
# ----------------------------------------------------------------------------
def _pool_linear_kernel(x_ref, w_ref, b_ref, o_ref):
    pooled = jnp.mean(x_ref[...].astype(jnp.float32), axis=1)       # (N, Cp)
    o_ref[...] = jnp.dot(pooled, w_ref[...],
                         preferred_element_type=jnp.float32) + b_ref[...]


def pool_linear(x_flat, lin_w, lin_b):
    # x_flat: (N, H*W, Cp) bf16, lin_w: (Cp, NCp) f32 — tiny at these shapes.
    N = x_flat.shape[0]
    ncp = lin_w.shape[1]
    return pl.pallas_call(
        _pool_linear_kernel,
        out_shape=jax.ShapeDtypeStruct((N, ncp), jnp.float32),
        in_specs=[pl.BlockSpec(memory_space=pltpu.MemorySpace.VMEM)] * 3,
        out_specs=pl.BlockSpec(memory_space=pltpu.MemorySpace.VMEM),
    )(x_flat, lin_w, lin_b.reshape(1, ncp))


# ----------------------------------------------------------------------------
# im2col glue (plain JAX, bf16 end-to-end).  Patch column order is
# (kh, kw, cin), matching the pre-transposed weight layout from init.
# ----------------------------------------------------------------------------
def _im2col(x, ks, stride):
    N, H, W, C = x.shape
    p = ks // 2
    xp = jnp.pad(x, ((0, 0), (p, p), (p, p), (0, 0)))
    Ho = (H + 2 * p - ks) // stride + 1
    Wo = (W + 2 * p - ks) // stride + 1
    cols = []
    for di in range(ks):
        for dj in range(ks):
            cols.append(xp[:, di:di + stride * Ho:stride,
                            dj:dj + stride * Wo:stride, :])
    patches = jnp.stack(cols, axis=3)                # (N, Ho, Wo, ks*ks, C)
    return patches.reshape(N, Ho, Wo, ks * ks * C), Ho, Wo


# ----------------------------------------------------------------------------
# Fused conv + BatchNorm(train, batch stats) + LeakyReLU (+ residual).
# Pass 1: tiled MXU matmul (bf16 in, f32 acc) + per-M-tile partial BN stats.
# Pass 2: normalize + affine + LeakyReLU (+ residual), tiled.
# ----------------------------------------------------------------------------
def conv_bn_lrelu(x, params, stride, residual=None):
    wk, gamma, beta = params["wk"], params["gamma"], params["beta"]
    ks, cout_p = params["ks"], params["cout_p"]

    N, H, W, C = x.shape
    if ks == 1 and stride == 1:
        # 1x1 conv: im2col would be a pointless HBM copy.
        Ho, Wo = H, W
        pm = x.reshape(N * H * W, C)
    else:
        patches, Ho, Wo = _im2col(x, ks, stride)
        pm = patches.reshape(N * Ho * Wo, ks * ks * C)

    M = N * Ho * Wo
    K = pm.shape[1]

    tm = _pick_tm(M)
    m_tiles = -(-M // tm)
    M_pad = m_tiles * tm
    if M_pad != M:
        pm = jnp.pad(pm, ((0, M_pad - M), (0, 0)))
    needs_mask = (M_pad != M)

    tk = _pick_tk(K, cout_p)
    k_tiles = K // tk

    # -------- pass 1: tiled matmul + per-tile partial BN statistics --------
    def _tile_stats(z):
        """Per-M-tile (sum, centered M2) over valid rows (Chan-combinable)."""
        if needs_mask:
            m_idx = pl.program_id(0)
            row = tm * m_idx + lax.broadcasted_iota(jnp.int32, (tm, 1), 0)
            vld = (row < M).astype(jnp.float32)
            cnt = jnp.minimum(tm, M - m_idx * tm).astype(jnp.float32)
            s = jnp.sum(z * vld, axis=0, keepdims=True)
            d = (z - s / cnt) * vld
        else:
            s = jnp.sum(z, axis=0, keepdims=True)
            d = z - s * (1.0 / tm)
        m2 = jnp.sum(d * d, axis=0, keepdims=True)
        return s, m2

    def _epilogue(z, z_ref, st_ref):
        z_ref[...] = z.astype(z_ref.dtype)          # bf16 pre-activation
        s, m2 = _tile_stats(z)
        st_ref[0, :, :cout_p] = s                   # lane-dense slice stores
        st_ref[0, :, cout_p:] = m2

    if k_tiles == 1:
        # No reduction tiling: dot result goes straight to the output block.
        def mm_kernel(p_ref, w_ref, z_ref, st_ref):
            z = jnp.dot(p_ref[...], w_ref[...],
                        preferred_element_type=jnp.float32)
            _epilogue(z, z_ref, st_ref)
        scratch = []
    else:
        # f32 accumulator scratch required for exact accumulation (z is bf16).
        def mm_kernel(p_ref, w_ref, z_ref, st_ref, acc_ref):
            k = pl.program_id(1)

            @pl.when(k == 0)
            def _():
                acc_ref[...] = jnp.zeros_like(acc_ref)

            acc_ref[...] += jnp.dot(p_ref[...], w_ref[...],
                                    preferred_element_type=jnp.float32)

            @pl.when(k == k_tiles - 1)
            def _():
                _epilogue(acc_ref[...], z_ref, st_ref)
        scratch = [pltpu.VMEM((tm, cout_p), jnp.float32)]

    # Explicit VMEM budget for pass 1 (double-buffered ins/outs + scratch),
    # clamped to 48 MiB so it is safe on v7x (64 MiB physical VMEM).
    working = (2 * tm * tk * 2           # bf16 patch tiles, double-buffered
               + 2 * tk * cout_p * 2     # bf16 weight tiles
               + 2 * tm * cout_p * 2     # bf16 z tiles
               + 2 * 2 * cout_p * 4      # stats tiles
               + (tm * cout_p * 4 if k_tiles > 1 else 0))
    vmem_limit = int(min(48 * 2 ** 20, max(32 * 2 ** 20, 2 * working)))

    z, stats = pl.pallas_call(
        mm_kernel,
        grid=(m_tiles, k_tiles),
        in_specs=[
            pl.BlockSpec((tm, tk), lambda m, k: (m, k)),
            pl.BlockSpec((tk, cout_p), lambda m, k: (k, 0)),
        ],
        out_specs=[
            pl.BlockSpec((tm, cout_p), lambda m, k: (m, 0)),
            pl.BlockSpec((1, 1, 2 * cout_p), lambda m, k: (m, 0, 0)),
        ],
        out_shape=[
            jax.ShapeDtypeStruct((M_pad, cout_p), jnp.bfloat16),
            jax.ShapeDtypeStruct((m_tiles, 1, 2 * cout_p), jnp.float32),
        ],
        scratch_shapes=scratch,
        compiler_params=pltpu.CompilerParams(
            dimension_semantics=("parallel", "arbitrary"),
            vmem_limit_bytes=vmem_limit),
    )(pm, wk)

    # ---- Chan-style combine of per-tile (sum, centered M2) -> batch stats ----
    stats = stats.reshape(m_tiles, 2 * cout_p)
    s_t = stats[:, :cout_p]
    m2_t = stats[:, cout_p:]
    counts = jnp.array([min(tm, M - i * tm) for i in range(m_tiles)],
                       jnp.float32)[:, None]
    mean = jnp.sum(s_t, axis=0) / M
    tile_mean = s_t / counts
    m2_tot = jnp.sum(m2_t, axis=0) + jnp.sum(
        counts * jnp.square(tile_mean - mean), axis=0)
    var = m2_tot / M                                   # biased (BN train mode)
    inv = lax.rsqrt(var + BN_EPS)
    scale = (gamma * inv).reshape(1, cout_p)
    shift = (beta - mean * gamma * inv).reshape(1, cout_p)

    # -------- pass 2: normalize + affine + LeakyReLU (+ residual), tiled ----
    bn_in_specs = [
        pl.BlockSpec((tm, cout_p), lambda m: (m, 0)),
        pl.BlockSpec((1, cout_p), lambda m: (0, 0)),
        pl.BlockSpec((1, cout_p), lambda m: (0, 0)),
    ]
    bn_out_spec = pl.BlockSpec((tm, cout_p), lambda m: (m, 0))
    bn_cparams = pltpu.CompilerParams(dimension_semantics=("parallel",))
    out_shape = jax.ShapeDtypeStruct((M_pad, cout_p), jnp.bfloat16)

    if residual is None:
        out = pl.pallas_call(
            _bn_lrelu_kernel, grid=(m_tiles,),
            in_specs=bn_in_specs, out_specs=bn_out_spec,
            out_shape=out_shape, compiler_params=bn_cparams,
        )(z, scale, shift)
    else:
        r = residual.reshape(M, cout_p)
        if M_pad != M:
            r = jnp.pad(r, ((0, M_pad - M), (0, 0)))
        out = pl.pallas_call(
            _bn_lrelu_res_kernel, grid=(m_tiles,),
            in_specs=bn_in_specs + [pl.BlockSpec((tm, cout_p), lambda m: (m, 0))],
            out_specs=bn_out_spec,
            out_shape=out_shape, compiler_params=bn_cparams,
        )(z, scale, shift, r)

    if M_pad != M:
        out = out[:M]
    return out.reshape(N, Ho, Wo, cout_p)


# ----------------------------------------------------------------------------
# Deterministic parameter construction (mirrors Darknet.__init__).
# Weight layout transform + channel padding are hoisted here (done once).
# ----------------------------------------------------------------------------
def _init_conv_bn(key, ni, nf, ks, cin_p, cout_p):
    k1, k2, k3 = jax.random.split(key, 3)
    w = 0.1 * jax.random.normal(k1, (nf, ni, ks, ks), jnp.float32)
    gamma = 1.0 + 0.1 * jax.random.normal(k2, (nf,), jnp.float32)
    beta = 0.1 * jax.random.normal(k3, (nf,), jnp.float32)
    # (Cout, Cin, kh, kw) -> (kh, kw, Cin_p, Cout_p) -> (K, Cout_p), bf16
    wt = jnp.transpose(w, (2, 3, 1, 0))
    wt = jnp.pad(wt, ((0, 0), (0, 0), (0, cin_p - ni), (0, cout_p - nf)))
    wk = wt.reshape(ks * ks * cin_p, cout_p).astype(jnp.bfloat16)
    gamma_p = jnp.pad(gamma, (0, cout_p - nf))
    beta_p = jnp.pad(beta, (0, cout_p - nf))
    return dict(wk=wk, gamma=gamma_p, beta=beta_p, ks=ks, cout_p=cout_p)


def init_darknet(key, num_blocks, num_classes, nf=32):
    layers = []
    key, k = jax.random.split(key)
    layers.append(("conv",
                   _init_conv_bn(k, 3, nf, 3, cin_p=3,
                                 cout_p=_round_up(nf, LANE)), 1))
    for i, nb in enumerate(num_blocks):
        stride = 2 - (i == 1)
        key, k = jax.random.split(key)
        layers.append(("conv",
                       _init_conv_bn(k, nf, nf * 2, 3,
                                     cin_p=_round_up(nf, LANE),
                                     cout_p=_round_up(nf * 2, LANE)), stride))
        for _ in range(nb):
            key, k1, k2 = jax.random.split(key, 3)
            c1 = _init_conv_bn(k1, nf * 2, nf, 1,
                               cin_p=_round_up(nf * 2, LANE),
                               cout_p=_round_up(nf, LANE))      # ResLayer.conv1
            c2 = _init_conv_bn(k2, nf, nf * 2, 3,
                               cin_p=_round_up(nf, LANE),
                               cout_p=_round_up(nf * 2, LANE))  # ResLayer.conv2
            layers.append(("res", (c1, c2), 1))
        nf *= 2
    key, k1, k2 = jax.random.split(key, 3)
    lin_w = 0.1 * jax.random.normal(k1, (nf, num_classes), jnp.float32)
    lin_b = 0.1 * jax.random.normal(k2, (num_classes,), jnp.float32)
    cp = _round_up(nf, LANE)
    ncp = _round_up(num_classes, LANE)
    lin_w_p = jnp.pad(lin_w, ((0, cp - nf), (0, ncp - num_classes)))
    lin_b_p = jnp.pad(lin_b, (0, ncp - num_classes))
    return layers, (lin_w_p, lin_b_p, num_classes)


def darknet_forward(x_nchw, layers, head):
    # PyTorch input is NCHW; kernels use NHWC, bf16 activations end-to-end
    # (channels padded to 128 from layer 1 on; padded channels stay zero).
    x = jnp.transpose(x_nchw, (0, 2, 3, 1)).astype(jnp.bfloat16)
    for kind, p, stride in layers:
        if kind == "conv":
            x = conv_bn_lrelu(x, p, stride=stride)
        else:  # ResLayer: x + conv2(conv1(x))
            c1, c2 = p
            h = conv_bn_lrelu(x, c1, stride=1)
            x = conv_bn_lrelu(h, c2, stride=1, residual=x)
    N, H, W, Cp = x.shape
    lin_w, lin_b, nc = head
    out = pool_linear(x.reshape(N, H * W, Cp), lin_w, lin_b)
    return out[:, :nc]


if __name__ == "__main__":
    key = jax.random.PRNGKey(0)
    kx, kp = jax.random.split(key)

    num_blocks = [1, 2]
    num_classes = 10
    nf = 8

    x = jax.random.normal(kx, (2, 3, 16, 16), jnp.float32)  # NCHW like PyTorch
    layers, head = init_darknet(kp, num_blocks, num_classes, nf=nf)

    out = darknet_forward(x, layers, head)
    out = jax.block_until_ready(out)
    assert out.shape == (2, num_classes), out.shape
    assert jnp.all(jnp.isfinite(out))
    print("KERNEL_OK")
</pallas_src>

<mosaic_0001>
module attributes {stable_mosaic.version = 11 : i64} {
  func.func @mm_kernel(%arg0: i32, %arg1: i32, %arg2: memref<256x27xbf16, #tpu.memory_space<vmem>>, %arg3: memref<27x128xbf16, #tpu.memory_space<vmem>>, %arg4: memref<256x128xbf16, #tpu.memory_space<vmem>>, %arg5: memref<1x1x256xf32, #tpu.memory_space<vmem>>) attributes {dimension_semantics = [#tpu.dimension_semantics<parallel>, #tpu.dimension_semantics<arbitrary>], iteration_bounds = array<i64: 2, 1>, scalar_prefetch = 0 : i64, scratch_operands = 0 : i64, tpu.core_type = #tpu.core_type<tc>, window_params = [{transform_indices = @transform_0, window_bounds = array<i64: 256, 27>}, {transform_indices = @transform_1, window_bounds = array<i64: 27, 128>}, {transform_indices = @transform_2, window_bounds = array<i64: 256, 128>}, {transform_indices = @transform_3, window_bounds = array<i64: 1, 1, 256>}]} {
    %c0 = arith.constant 0 : index
    %c0_0 = arith.constant 0 : index
    %0 = vector.load %arg2[%c0, %c0_0] : memref<256x27xbf16, #tpu.memory_space<vmem>>, vector<256x27xbf16>
    %c0_1 = arith.constant 0 : index
    %c0_2 = arith.constant 0 : index
    %1 = vector.load %arg3[%c0_1, %c0_2] : memref<27x128xbf16, #tpu.memory_space<vmem>>, vector<27x128xbf16>
    %cst = arith.constant dense<0.000000e+00> : vector<256x128xf32>
    %2 = tpu.matmul %0, %1, %cst {dimension_numbers = #tpu.dot_dimension_numbers<[1], [0], [0], [1], [0, 0, 1, 1], [], []>} : vector<256x27xbf16>, vector<27x128xbf16>, vector<256x128xf32> -> vector<256x128xf32>
    %3 = arith.truncf %2 : vector<256x128xf32> to vector<256x128xbf16>
    %c0_3 = arith.constant 0 : index
    %c0_4 = arith.constant 0 : index
    %4 = vector.load %arg4[%c0_3, %c0_4] : memref<256x128xbf16, #tpu.memory_space<vmem>>, vector<256x128xbf16>
    tpu.vector_store %arg4[%c0_3, %c0_4], %3 {strides = array<i32>} : memref<256x128xbf16, #tpu.memory_space<vmem>>, vector<256x128xbf16>,
    %cst_5 = arith.constant dense<0.000000e+00> : vector<128xf32>
    %5 = vector.multi_reduction <add>, %2, %cst_5 [0] : vector<256x128xf32> to vector<128xf32>
    %6 = vector.shape_cast %5 : vector<128xf32> to vector<1x128xf32>
    %cst_6 = arith.constant 3.906250e-03 : f32
    %7 = vector.broadcast %cst_6 : f32 to vector<1x128xf32>
    %8 = arith.mulf %6, %7 : vector<1x128xf32>
    %9 = vector.broadcast %8 : vector<1x128xf32> to vector<256x128xf32>
    %10 = arith.subf %2, %9 : vector<256x128xf32>
    %11 = arith.mulf %10, %10 : vector<256x128xf32>
    %cst_7 = arith.constant dense<0.000000e+00> : vector<128xf32>
    %12 = vector.multi_reduction <add>, %11, %cst_7 [0] : vector<256x128xf32> to vector<128xf32>
    %13 = vector.shape_cast %12 : vector<128xf32> to vector<1x128xf32>
    %c0_8 = arith.constant 0 : index
    %c0_9 = arith.constant 0 : index
    %c0_10 = arith.constant 0 : index
    %14 = vector.load %arg5[%c0_8, %c0_9, %c0_10] : memref<1x1x256xf32, #tpu.memory_space<vmem>>, vector<1x1x128xf32>
    %15 = vector.shape_cast %14 : vector<1x1x128xf32> to vector<1x128xf32>
    %16 = vector.shape_cast %6 : vector<1x128xf32> to vector<1x1x128xf32>
    tpu.vector_store %arg5[%c0_8, %c0_9, %c0_10], %16 {strides = array<i32>} : memref<1x1x256xf32, #tpu.memory_space<vmem>>, vector<1x1x128xf32>,
    %c0_11 = arith.constant 0 : index
    %c0_12 = arith.constant 0 : index
    %c128 = arith.constant 128 : index
    %17 = vector.load %arg5[%c0_11, %c0_12, %c128] : memref<1x1x256xf32, #tpu.memory_space<vmem>>, vector<1x1x128xf32>
    %18 = vector.shape_cast %17 : vector<1x1x128xf32> to vector<1x128xf32>
    %19 = vector.shape_cast %13 : vector<1x128xf32> to vector<1x1x128xf32>
    tpu.vector_store %arg5[%c0_11, %c0_12, %c128], %19 {strides = array<i32>} : memref<1x1x256xf32, #tpu.memory_space<vmem>>, vector<1x1x128xf32>,
    return
  }
  func.func @transform_0(%arg0: i32, %arg1: i32) -> (i32, i32) {
    %c0_i32 = arith.constant 0 : i32
    return %arg0, %arg1 : i32, i32
  }
  func.func @transform_1(%arg0: i32, %arg1: i32) -> (i32, i32) {
    %c0_i32 = arith.constant 0 : i32
    %c0_i32_0 = arith.constant 0 : i32
    return %arg1, %c0_i32 : i32, i32
  }
  func.func @transform_2(%arg0: i32, %arg1: i32) -> (i32, i32) {
    %c0_i32 = arith.constant 0 : i32
    %c0_i32_0 = arith.constant 0 : i32
    return %arg0, %c0_i32 : i32, i32
  }
  func.func @transform_3(%arg0: i32, %arg1: i32) -> (i32, i32, i32) {
    %c0_i32 = arith.constant 0 : i32
    %c0_i32_0 = arith.constant 0 : i32
    %c0_i32_1 = arith.constant 0 : i32
    return %arg0, %c0_i32, %c0_i32_0 : i32, i32, i32
  }
}

</mosaic_0001>

<llo_original>
// kernel: tpu_custom_call.1
$region0: #{tpu_custom_call.1}
  #allocation0 [shape = 'u32[]', space=smem, size = 0x4, offset = 0x4, fixed_abs, tag = 'smem constant byte address 0x4 - core index']
  #allocation1 [shape = 'u32[144,128]{1,0:T(1,128)}', space=vmem, size = 0x12000, scoped, tag = 'internal scratch']
  %s0 = inlined_call_operand.vmem [shape: bf16[512,27], index: 0, kind: input, shape index: {}]
  %s1 = inlined_call_operand.vmem [shape: bf16[27,128], index: 1, kind: input, shape index: {}]
  %s2 = inlined_call_operand.hbm [shape: bf16[512,128], index: 2, kind: output, shape index: {0}]
  %s3 = inlined_call_operand.hbm [shape: f32[2,1,256], index: 3, kind: output, shape index: {1}]
  %4 = xla_tuple %s2, %s3
  %s5 = sld [smem:[#allocation0]]
  $region49: #{tpu_custom_call.1} parent=0
    _
  %s7 = ssub.s32 1, %s5
  %s8 = scalar_select 0, %s7, %s5
  $region1: #{tpu_custom_call.1} parent=0
    #allocation2 [shape = 'u8[131072]{0}', space=vmem, size = 0x20000, scoped, tag = 'output window, operand 0']
    #allocation3 [shape = 's32[2]{0}', space=sflag, size = 0x8, scoped, tag = 'scoped memory for tpu_custom_call.1']
    #allocation4 [shape = 'u8[2048]{0}', space=vmem, size = 0x800, scoped, tag = 'output window, operand 1']
    #allocation5 [shape = 's32[2]{0}', space=sflag, size = 0x8, scoped, tag = 'scoped memory for tpu_custom_call.1']
    %9 = vsyncpa [#allocation3], 0
    %s10 = scalar_lea.sflag [#allocation3], 1
    %11 = vsyncpa %s10, 0
    %12 = vsyncpa [#allocation5], 0
    %s13 = scalar_lea.sflag [#allocation5], 1
    %14 = vsyncpa %s13, 0
    loop: start=0, step=1, limit=4
    $region2: #{tpu_custom_call.1} parent=1 // loop_pre_header
      _
    $region3: #{tpu_custom_call.1} parent=1 // loop_header
      %s16 = sphi 0, %s20
      %p17 = scmp.ge.s32.totalorder %s16, 4
      %s23 = sphi 0, %s35
      %s24 = sphi 0, %s31
      %s25 = sphi 0, %s23
      %s26 = sphi 0, %s24
      %s27 = sphi 0, %s25
      %s28 = sphi 0, %s26
      %s40 = sphi 0, %s42
      %s43 = sphi 0, %s40
      %s44 = sphi 0, %s43
      %s60 = sphi 0, %s44
      %s66 = sphi 0, %s68
      %s69 = sphi 0, %s66
      %s70 = sphi 0, %s69
      %s86 = sphi 0, %s70
      %s92 = sphi 0, %s94
      %s95 = sphi 0, %s92
      %s96 = sphi 0, %s95
      %s112 = sphi 0, %s96
      %s118 = sphi 0, %s120
      %s121 = sphi 0, %s118
      %s122 = sphi 0, %s121
      %s138 = sphi 0, %s122
    $region4: #{tpu_custom_call.1} parent=1 // loop_header_branch
      %19 = sbr.rel (%p17) target = $region8
    $region5: #{tpu_custom_call.1} parent=1 // loop_body
      %s21 = ssub.s32 %s16, 1
      %s22 = ssub.s32 %s16, 2
      %s29 = sadd.s32 1, %s24
      %p30 = scmp.ge.s32.totalorder %s29, 1
      %s31 = scalar_select %p30, 0, %s29
      %s32 = sadd.s32 1, %s23
      %s33 = scalar_select %p30, %s32, %s23
      %p34 = scmp.ge.s32.totalorder %s33, 2
      %s35 = scalar_select %p34, 0, %s33
      %s36 = ssub.s32 %s23, %s35
      %s37 = ssub.s32 %s24, %s31
      %s38 = sor.u32 %s36, %s37
      %p39 = scmp.eq.s32.totalorder %s38, 0
      %s41 = sadd.s32 %s40, 1
      %s42 = scalar_select %p39, %s40, %s41
      %p45 = pneg %p39
      %p46 = scmp.eq.s32.totalorder %s16, 1
      %p47 = por %p45, %p46
      %p48 = scmp.ne.s32.totalorder %s40, %s43
      %p49 = scmp.eq.s32.totalorder %s16, 0
      %p50 = por %p48, %p49
      %p51 = scmp.ne.s32.totalorder %s40, %s43
      %p52 = scmp.eq.s32.totalorder %s21, 1
      %p53 = por %p51, %p52
      %p54 = scmp.ne.s32.totalorder %s43, %s44
      %p55 = scmp.eq.s32.totalorder %s21, 0
      %p56 = por %p54, %p55
      %p57 = scmp.ne.s32.totalorder %s43, %s44
      %p58 = scmp.eq.s32.totalorder %s22, 1
      %p59 = por %p57, %p58
      %p61 = scmp.ne.s32.totalorder %s44, %s60
      %p62 = scmp.eq.s32.totalorder %s22, 0
      %p63 = por %p61, %p62
      %s64 = ssub.s32 %s24, %s31
      %p65 = scmp.eq.s32.totalorder %s64, 0
      %s67 = sadd.s32 %s66, 1
      %s68 = scalar_select %p65, %s66, %s67
      %p71 = pneg %p65
      %p72 = scmp.eq.s32.totalorder %s16, 1
      %p73 = por %p71, %p72
      %p74 = scmp.ne.s32.totalorder %s66, %s69
      %p75 = scmp.eq.s32.totalorder %s16, 0
      %p76 = por %p74, %p75
      %p77 = scmp.ne.s32.totalorder %s66, %s69
      %p78 = scmp.eq.s32.totalorder %s21, 1
      %p79 = por %p77, %p78
      %p80 = scmp.ne.s32.totalorder %s69, %s70
      %p81 = scmp.eq.s32.totalorder %s21, 0
      %p82 = por %p80, %p81
      %p83 = scmp.ne.s32.totalorder %s69, %s70
      %p84 = scmp.eq.s32.totalorder %s22, 1
      %p85 = por %p83, %p84
      %p87 = scmp.ne.s32.totalorder %s70, %s86
      %p88 = scmp.eq.s32.totalorder %s22, 0
      %p89 = por %p87, %p88
      %s90 = ssub.s32 %s23, %s35
      %p91 = scmp.eq.s32.totalorder %s90, 0
      %s93 = sadd.s32 %s92, 1
      %s94 = scalar_select %p91, %s92, %s93
      %p97 = pneg %p91
      %p98 = scmp.eq.s32.totalorder %s16, 1
      %p99 = por %p97, %p98
      %p100 = scmp.ne.s32.totalorder %s92, %s95
      %p101 = scmp.eq.s32.totalorder %s16, 0
      %p102 = por %p100, %p101
      %p103 = scmp.ne.s32.totalorder %s92, %s95
      %p104 = scmp.eq.s32.totalorder %s21, 1
      %p105 = por %p103, %p104
      %p106 = scmp.ne.s32.totalorder %s95, %s96
      %p107 = scmp.eq.s32.totalorder %s21, 0
      %p108 = por %p106, %p107
      %p109 = scmp.ne.s32.totalorder %s95, %s96
      %p110 = scmp.eq.s32.totalorder %s22, 1
      %p111 = por %p109, %p110
      %p113 = scmp.ne.s32.totalorder %s96, %s112
      %p114 = scmp.eq.s32.totalorder %s22, 0
      %p115 = por %p113, %p114
      %s116 = ssub.s32 %s23, %s35
      %p117 = scmp.eq.s32.totalorder %s116, 0
      %s119 = sadd.s32 %s118, 1
      %s120 = scalar_select %p117, %s118, %s119
      %p123 = pneg %p117
      %p124 = scmp.eq.s32.totalorder %s16, 1
      %p125 = por %p123, %p124
      %p126 = scmp.ne.s32.totalorder %s118, %s121
      %p127 = scmp.eq.s32.totalorder %s16, 0
      %p128 = por %p126, %p127
      %p129 = scmp.ne.s32.totalorder %s118, %s121
      %p130 = scmp.eq.s32.totalorder %s21, 1
      %p131 = por %p129, %p130
      %p132 = scmp.ne.s32.totalorder %s121, %s122
      %p133 = scmp.eq.s32.totalorder %s21, 0
      %p134 = por %p132, %p133
      %p135 = scmp.ne.s32.totalorder %s121, %s122
      %p136 = scmp.eq.s32.totalorder %s22, 1
      %p137 = por %p135, %p136
      %p139 = scmp.ne.s32.totalorder %s122, %s138
      %p140 = scmp.eq.s32.totalorder %s22, 0
      %p141 = por %p139, %p140
      %p142 = scmp.le.s32.totalorder 1, %s16
      %p143 = scmp.lt.s32.totalorder %s16, 3
      %p144 = pnand %p142, %p143
      %p145 = pneg %p144
      // Predicated region
      $region9: #{tpu_custom_call.1} parent=5 // pred_check
        _
      $region10: #{tpu_custom_call.1} parent=5 // pred_check_branch
        %147 = sbr.rel (%p144) target = $region12
      $region11: #{tpu_custom_call.1} parent=5 // pred_region
        %s148 = ssub.s32 %s16, 1
        // Predicated region
        $region13: #{tpu_custom_call.1} parent=11 // pred_check
          %p149 = pneg %p82
        $region14: #{tpu_custom_call.1} parent=11 // pred_check_branch
          %151 = sbr.rel (%p149) target = $region16
        $region15: #{tpu_custom_call.1} parent=11 // pred_region
          %s152 = smul.u32 4, %s26
          %p153 = scmp.lt.s32.totalorder %s152, 3
          %s154 = scalar_select %p153, %s152, 3
          %s155 = smul.addr %s154, 4
          %s156 = scalar_lea.vmem %s1, %s155
          %s157 = smul.u32 4, %s26
        $region16: #{tpu_custom_call.1} parent=11 // pred_fallthru
          _
      $region12: #{tpu_custom_call.1} parent=5 // pred_fallthru
        _
      %p158 = scmp.lt.s32.totalorder %s16, 2
      // Predicated region
      $region17: #{tpu_custom_call.1} parent=5 // pred_check
        %p159 = pneg %p158
      $region18: #{tpu_custom_call.1} parent=5 // pred_check_branch
        %161 = sbr.rel (%p159) target = $region20
      $region19: #{tpu_custom_call.1} parent=5 // pred_region
        // Predicated region
        $region21: #{tpu_custom_call.1} parent=19 // pred_check
          %p162 = pneg %p50
        $region22: #{tpu_custom_call.1} parent=19 // pred_check_branch
          %164 = sbr.rel (%p162) target = $region24
        $region23: #{tpu_custom_call.1} parent=19 // pred_region
          %s165 = smul.u32 32, %s23
          %p166 = scmp.lt.s32.totalorder %s165, 63
          %s167 = scalar_select %p166, %s165, 63
          %p168 = scmp.lt.s32.totalorder %s24, 0
          %s169 = scalar_select %p168, %s24, 0
          %s170 = sadd.s32 %s169, %s167
          %s171 = smul.addr %s170, 4
          %s172 = scalar_lea.vmem %s0, %s171
          %s173 = smul.u32 32, %s23
        $region24: #{tpu_custom_call.1} parent=19 // pred_fallthru
          _
      $region20: #{tpu_custom_call.1} parent=5 // pred_fallthru
        _
      %p174 = scmp.le.s32.totalorder 1, %s16
      %p175 = scmp.lt.s32.totalorder %s16, 3
      %p176 = pnand %p174, %p175
      %p177 = pneg %p176
      // Predicated region
      $region25: #{tpu_custom_call.1} parent=5 // pred_check
        _
      $region26: #{tpu_custom_call.1} parent=5 // pred_check_branch
        %179 = sbr.rel (%p176) target = $region28
      $region27: #{tpu_custom_call.1} parent=5 // pred_region
        %s180 = ssub.s32 %s16, 1
        %s181 = smul.u32 32, %s25
        %p182 = scmp.lt.s32.totalorder %s181, 63
        %s183 = scalar_select %p182, %s181, 63
        %p184 = scmp.lt.s32.totalorder %s26, 0
        %s185 = scalar_select %p184, %s26, 0
        %s186 = sadd.s32 %s185, %s183
        %s187 = smul.addr %s186, 4
        %s188 = scalar_lea.vmem %s0, %s187
        %p189 = pneg %p56
        %p190 = pneg %p53
        %s191 = smul.u32 4, %s26
        %p192 = scmp.lt.s32.totalorder %s191, 3
        %s193 = scalar_select %p192, %s191, 3
        %s194 = smul.addr %s193, 4
        %s195 = scalar_lea.vmem %s1, %s194
        %p196 = pneg %p82
        %p197 = pneg %p79
        %p198 = pneg %p108
        %p199 = pneg %p105
        %s200 = sand.u32 %s95, 1
        %s201 = scalar_lea.sflag [#allocation3], %s200
        %s202 = sand.u32 %s95, 1
        %s203 = smul.addr %s202, 128
        %s204 = scalar_lea.vmem [#allocation2], %s203
        %p205 = pneg %p134
        %p206 = pneg %p131
        %s207 = sand.u32 %s121, 1
        %s208 = scalar_lea.sflag [#allocation5], %s207
        %s209 = sand.u32 %s121, 1
        %s210 = smul.addr %s209, 2
        %s211 = scalar_lea.vmem [#allocation4], %s210
        %s212 = smul.u32 32, %s25
        %p213 = scmp.lt.s32.totalorder %s212, 63
        %s214 = scalar_select %p213, %s212, 63
        %p215 = scmp.lt.s32.totalorder %s26, 0
        %s216 = scalar_select %p215, %s26, 0
        %s217 = sadd.s32 %s216, %s214
        %s218 = smul.addr %s217, 4
        %s219 = scalar_lea.vmem %s0, %s218
        %s220 = smul.u32 32, %s25
        %s221 = smul.u32 4, %s26
        %p222 = scmp.lt.s32.totalorder %s221, 3
        %s223 = scalar_select %p222, %s221, 3
        %s224 = smul.addr %s223, 4
        %s225 = scalar_lea.vmem %s1, %s224
        %s226 = smul.u32 4, %s26
        %s227 = smul.u32 32, %s25
        %v229 = vld [vmem:[%s219] sm:$0xf]
        %v230 = vld [vmem:[%s219 + $0x4] sm:$0xf]
        %v231 = vld [vmem:[%s219 + $0x8] sm:$0xf]
        %v232 = vld [vmem:[%s219 + $0xc] sm:$0xf]
        %v233 = vld [vmem:[%s219 + $0x10] sm:$0xf]
        %v234 = vld [vmem:[%s219 + $0x14] sm:$0xf]
        %v235 = vld [vmem:[%s219 + $0x18] sm:$0xf]
        %v236 = vld [vmem:[%s219 + $0x1c] sm:$0xf]
        %v237 = vld [vmem:[%s219 + $0x20] sm:$0xf]
        %v238 = vld [vmem:[%s219 + $0x24] sm:$0xf]
        %v239 = vld [vmem:[%s219 + $0x28] sm:$0xf]
        %v240 = vld [vmem:[%s219 + $0x2c] sm:$0xf]
        %v241 = vld [vmem:[%s219 + $0x30] sm:$0xf]
        %v242 = vld [vmem:[%s219 + $0x34] sm:$0xf]
        %v243 = vld [vmem:[%s219 + $0x38] sm:$0xf]
        %v244 = vld [vmem:[%s219 + $0x3c] sm:$0xf]
        %v245 = vld [vmem:[%s219 + $0x40] sm:$0xf]
        %v246 = vld [vmem:[%s219 + $0x44] sm:$0xf]
        %v247 = vld [vmem:[%s219 + $0x48] sm:$0xf]
        %v248 = vld [vmem:[%s219 + $0x4c] sm:$0xf]
        %v249 = vld [vmem:[%s219 + $0x50] sm:$0xf]
        %v250 = vld [vmem:[%s219 + $0x54] sm:$0xf]
        %v251 = vld [vmem:[%s219 + $0x58] sm:$0xf]
        %v252 = vld [vmem:[%s219 + $0x5c] sm:$0xf]
        %v253 = vld [vmem:[%s219 + $0x60] sm:$0xf]
        %v254 = vld [vmem:[%s219 + $0x64] sm:$0xf]
        %v255 = vld [vmem:[%s219 + $0x68] sm:$0xf]
        %v256 = vld [vmem:[%s219 + $0x6c] sm:$0xf]
        %v257 = vld [vmem:[%s219 + $0x70] sm:$0xf]
        %v258 = vld [vmem:[%s219 + $0x74] sm:$0xf]
        %v259 = vld [vmem:[%s219 + $0x78] sm:$0xf]
        %v260 = vld [vmem:[%s219 + $0x7c] sm:$0xf]
        %v261 = vld [vmem:[%s225] sm:$0xf]
        %v262 = vld [vmem:[%s225 + $0x4] sm:$0xf]
        %v263 = vld [vmem:[%s225 + $0x8] sm:$0xf]
        %v264 = vld [vmem:[%s225 + $0xc] sm:$0x3]
        %v297 = vunpack.c.l.b16 %v229
        %v298 = vunpack.c.l.b16 %v230
        %v299 = vunpack.c.l.b16 %v231
        %v300 = vunpack.c.l.b16 %v232
        %v301 = vunpack.c.l.b16 %v233
        %v302 = vunpack.c.l.b16 %v234
        %v303 = vunpack.c.l.b16 %v235
        %v304 = vunpack.c.l.b16 %v236
        %v305 = vunpack.c.l.b16 %v237
        %v306 = vunpack.c.l.b16 %v238
        %v307 = vunpack.c.l.b16 %v239
        %v308 = vunpack.c.l.b16 %v240
        %v309 = vunpack.c.l.b16 %v241
        %v310 = vunpack.c.l.b16 %v242
        %v311 = vunpack.c.l.b16 %v243
        %v312 = vunpack.c.l.b16 %v244
        %v313 = vunpack.c.l.b16 %v245
        %v314 = vunpack.c.l.b16 %v246
        %v315 = vunpack.c.l.b16 %v247
        %v316 = vunpack.c.l.b16 %v248
        %v317 = vunpack.c.l.b16 %v249
        %v318 = vunpack.c.l.b16 %v250
        %v319 = vunpack.c.l.b16 %v251
        %v320 = vunpack.c.l.b16 %v252
        %v321 = vunpack.c.l.b16 %v253
        %v322 = vunpack.c.l.b16 %v254
        %v323 = vunpack.c.l.b16 %v255
        %v324 = vunpack.c.l.b16 %v256
        %v325 = vunpack.c.l.b16 %v257
        %v326 = vunpack.c.l.b16 %v258
        %v327 = vunpack.c.l.b16 %v259
        %v328 = vunpack.c.l.b16 %v260
        %v329 = vpack.c.b16 %v298, %v297
        %v330 = vpack.c.b16 %v300, %v299
        %v331 = vpack.c.b16 %v302, %v301
        %v332 = vpack.c.b16 %v304, %v303
        %v333 = vpack.c.b16 %v306, %v305
        %v334 = vpack.c.b16 %v308, %v307
        %v335 = vpack.c.b16 %v310, %v309
        %v336 = vpack.c.b16 %v312, %v311
        %v337 = vpack.c.b16 %v314, %v313
        %v338 = vpack.c.b16 %v316, %v315
        %v339 = vpack.c.b16 %v318, %v317
        %v340 = vpack.c.b16 %v320, %v319
        %v341 = vpack.c.b16 %v322, %v321
        %v342 = vpack.c.b16 %v324, %v323
        %v343 = vpack.c.b16 %v326, %v325
        %v344 = vpack.c.b16 %v328, %v327
        %v349 = vunpack.c.l.b16 %v261
        %v350 = vunpack.c.l.b16 %v262
        %v351 = vunpack.c.l.b16 %v263
        %v352 = vunpack.c.l.b16 %v264
        %v353 = vpack.c.b16 %v350, %v349
        %v354 = vpack.c.b16 %v352, %v351
        %vm356 = vcmask 220160
        %v358 = vsel %vm356, %v329, 0
        %v361 = vsel %vm356, %v330, 0
        %v364 = vsel %vm356, %v331, 0
        %v367 = vsel %vm356, %v332, 0
        %v370 = vsel %vm356, %v333, 0
        %v373 = vsel %vm356, %v334, 0
        %v376 = vsel %vm356, %v335, 0
        %v379 = vsel %vm356, %v336, 0
        %v382 = vsel %vm356, %v337, 0
        %v385 = vsel %vm356, %v338, 0
        %v388 = vsel %vm356, %v339, 0
        %v391 = vsel %vm356, %v340, 0
        %v394 = vsel %vm356, %v341, 0
        %v397 = vsel %vm356, %v342, 0
        %v400 = vsel %vm356, %v343, 0
        %v403 = vsel %vm356, %v344, 0
        %vm405 = vcmask 1044480
        %vm406 = vcmask 1045504
        %v407 = vsel %vm405, 4294967295, 65535
        %v408 = vsel %vm406, %v407, 0
        %v410 = vand.u32 %v354, %v408
        %412 = vmatprep.subr.bf16.mxu0 0
        %413 = vmatpush1.bf16.msra.mxu0 %v353
        %414 = vmatprep.subr.bf16.mxu0 0
        %415 = vmatpush1.bf16.msra.mxu0 %v410
        %416 = vmatprep.subr.bf16.mxu0 0
        %417 = vmatpush1.bf16.msra.mxu0 0
        %418 = vmatprep.subr.bf16.mxu0 0
        %419 = vmatpush1.bf16.msra.mxu0 0
        %420 = vmatprep.subr.bf16.mxu0 0
        %421 = vmatpush1.bf16.msra.mxu0 0
        %422 = vmatprep.subr.bf16.mxu0 0
        %423 = vmatpush1.bf16.msra.mxu0 0
        %424 = vmatprep.subr.bf16.mxu0 0
        %425 = vmatpush1.bf16.msra.mxu0 0
        %426 = vmatprep.subr.bf16.mxu0 0
        %427 = vmatpush1.bf16.msra.mxu0 0
        %428 = vmatprep.subr.bf16.mxu0 0
        %429 = vmatpush1.bf16.msra.mxu0 0
        %430 = vmatprep.subr.bf16.mxu0 0
        %431 = vmatpush1.bf16.msra.mxu0 0
        %432 = vmatprep.subr.bf16.mxu0 0
        %433 = vmatpush1.bf16.msra.mxu0 0
        %434 = vmatprep.subr.bf16.mxu0 0
        %435 = vmatpush1.bf16.msra.mxu0 0
        %436 = vmatprep.subr.bf16.mxu0 0
        %437 = vmatpush1.bf16.msra.mxu0 0
        %438 = vmatprep.subr.bf16.mxu0 0
        %439 = vmatpush1.bf16.msra.mxu0 0
        %440 = vmatprep.subr.bf16.mxu0 0
        %441 = vmatpush1.bf16.msra.mxu0 0
        %442 = vmatprep.subr.bf16.mxu0 0
        %443 = vmatpush1.bf16.msra.mxu0 0
        %444 = vmatprep.mubr.bf16.mxu0 0
        %445 = vmatmul.mubr.bf16.gmra.mrb[0].mxu0 %v358
        %v446 = vpop.f32.mrb[0].mxu0
        %v447 = vadd.f32 0.0, %v446
        %v448 = vpop.f32.mrb[0].mxu0
        %v449 = vpop.f32.mrb[0].mxu0
        %v450 = vadd.f32 0.0, %v449
        %v451 = vpop.f32.mrb[0].mxu0
        %452 = vmatprep.mubr.bf16.mxu0 0
        %453 = vmatmul.mubr.bf16.gmra.mrb[0].mxu0 %v361
        %v454 = vpop.f32.mrb[0].mxu0
        %v455 = vadd.f32 0.0, %v454
        %v456 = vpop.f32.mrb[0].mxu0
        %v457 = vpop.f32.mrb[0].mxu0
        %v458 = vadd.f32 0.0, %v457
        %v459 = vpop.f32.mrb[0].mxu0
        %460 = vmatprep.mubr.bf16.mxu0 0
        %461 = vmatmul.mubr.bf16.gmra.mrb[0].mxu0 %v364
        %v462 = vpop.f32.mrb[0].mxu0
        %v463 = vadd.f32 0.0, %v462
        %v464 = vpop.f32.mrb[0].mxu0
        %v465 = vpop.f32.mrb[0].mxu0
        %v466 = vadd.f32 0.0, %v465
        %v467 = vpop.f32.mrb[0].mxu0
        %468 = vmatprep.mubr.bf16.mxu0 0
        %469 = vmatmul.mubr.bf16.gmra.mrb[0].mxu0 %v367
        %v470 = vpop.f32.mrb[0].mxu0
        %v471 = vadd.f32 0.0, %v470
        %v472 = vpop.f32.mrb[0].mxu0
        %v473 = vpop.f32.mrb[0].mxu0
        %v474 = vadd.f32 0.0, %v473
        %v475 = vpop.f32.mrb[0].mxu0
        %476 = vmatprep.mubr.bf16.mxu0 0
        %477 = vmatmul.mubr.bf16.gmra.mrb[0].mxu0 %v370
        %v478 = vpop.f32.mrb[0].mxu0
        %v479 = vadd.f32 0.0, %v478
        %v480 = vpop.f32.mrb[0].mxu0
        %v481 = vpop.f32.mrb[0].mxu0
        %v482 = vadd.f32 0.0, %v481
        %v483 = vpop.f32.mrb[0].mxu0
        %484 = vmatprep.mubr.bf16.mxu0 0
        %485 = vmatmul.mubr.bf16.gmra.mrb[0].mxu0 %v373
        %v486 = vpop.f32.mrb[0].mxu0
        %v487 = vadd.f32 0.0, %v486
        %v488 = vpop.f32.mrb[0].mxu0
        %v489 = vpop.f32.mrb[0].mxu0
        %v490 = vadd.f32 0.0, %v489
        %v491 = vpop.f32.mrb[0].mxu0
        %492 = vmatprep.mubr.bf16.mxu0 0
        %493 = vmatmul.mubr.bf16.gmra.mrb[0].mxu0 %v376
        %v494 = vpop.f32.mrb[0].mxu0
        %v495 = vadd.f32 0.0, %v494
        %v496 = vpop.f32.mrb[0].mxu0
        %v497 = vpop.f32.mrb[0].mxu0
        %v498 = vadd.f32 0.0, %v497
        %v499 = vpop.f32.mrb[0].mxu0
        %500 = vmatprep.mubr.bf16.mxu0 0
        %501 = vmatmul.mubr.bf16.gmra.mrb[0].mxu0 %v379
        %v502 = vpop.f32.mrb[0].mxu0
        %v503 = vadd.f32 0.0, %v502
        %v504 = vpop.f32.mrb[0].mxu0
        %v505 = vpop.f32.mrb[0].mxu0
        %v506 = vadd.f32 0.0, %v505
        %v507 = vpop.f32.mrb[0].mxu0
        %508 = vmatprep.mubr.bf16.mxu0 0
        %509 = vmatmul.mubr.bf16.gmra.mrb[0].mxu0 %v382
        %v510 = vpop.f32.mrb[0].mxu0
        %v511 = vadd.f32 0.0, %v510
        %v512 = vpop.f32.mrb[0].mxu0
        %v513 = vpop.f32.mrb[0].mxu0
        %v514 = vadd.f32 0.0, %v513
        %v515 = vpop.f32.mrb[0].mxu0
        %516 = vmatprep.mubr.bf16.mxu0 0
        %517 = vmatmul.mubr.bf16.gmra.mrb[0].mxu0 %v385
        %v518 = vpop.f32.mrb[0].mxu0
        %v519 = vadd.f32 0.0, %v518
        %v520 = vpop.f32.mrb[0].mxu0
        %v521 = vpop.f32.mrb[0].mxu0
        %v522 = vadd.f32 0.0, %v521
        %v523 = vpop.f32.mrb[0].mxu0
        %524 = vmatprep.mubr.bf16.mxu0 0
        %525 = vmatmul.mubr.bf16.gmra.mrb[0].mxu0 %v388
        %v526 = vpop.f32.mrb[0].mxu0
        %v527 = vadd.f32 0.0, %v526
        %v528 = vpop.f32.mrb[0].mxu0
        %v529 = vpop.f32.mrb[0].mxu0
        %v530 = vadd.f32 0.0, %v529
        %v531 = vpop.f32.mrb[0].mxu0
        %532 = vmatprep.mubr.bf16.mxu0 0
        %533 = vmatmul.mubr.bf16.gmra.mrb[0].mxu0 %v391
        %v534 = vpop.f32.mrb[0].mxu0
        %v535 = vadd.f32 0.0, %v534
        %v536 = vpop.f32.mrb[0].mxu0
        %v537 = vpop.f32.mrb[0].mxu0
        %v538 = vadd.f32 0.0, %v537
        %v539 = vpop.f32.mrb[0].mxu0
        %540 = vmatprep.mubr.bf16.mxu0 0
        %541 = vmatmul.mubr.bf16.gmra.mrb[0].mxu0 %v394
        %v542 = vpop.f32.mrb[0].mxu0
        %v543 = vadd.f32 0.0, %v542
        %v544 = vpop.f32.mrb[0].mxu0
        %v545 = vpop.f32.mrb[0].mxu0
        %v546 = vadd.f32 0.0, %v545
        %v547 = vpop.f32.mrb[0].mxu0
        %548 = vmatprep.mubr.bf16.mxu0 0
        %549 = vmatmul.mubr.bf16.gmra.mrb[0].mxu0 %v397
        %v550 = vpop.f32.mrb[0].mxu0
        %v551 = vadd.f32 0.0, %v550
        %v552 = vpop.f32.mrb[0].mxu0
        %v553 = vpop.f32.mrb[0].mxu0
        %v554 = vadd.f32 0.0, %v553
        %v555 = vpop.f32.mrb[0].mxu0
        %556 = vmatprep.mubr.bf16.mxu0 0
        %557 = vmatmul.mubr.bf16.gmra.mrb[0].mxu0 %v400
        %v558 = vpop.f32.mrb[0].mxu0
        %v559 = vadd.f32 0.0, %v558
        %v560 = vpop.f32.mrb[0].mxu0
        %v561 = vpop.f32.mrb[0].mxu0
        %v562 = vadd.f32 0.0, %v561
        %v563 = vpop.f32.mrb[0].mxu0
        %564 = vmatprep.mubr.bf16.mxu0 0
        %565 = vmatmul.mubr.bf16.gmra.mrb[0].mxu0 %v403
        %v566 = vpop.f32.mrb[0].mxu0
        %v567 = vadd.f32 0.0, %v566
        %v568 = vpop.f32.mrb[0].mxu0
        %v569 = vpop.f32.mrb[0].mxu0
        %v570 = vadd.f32 0.0, %v569
        %v571 = vpop.f32.mrb[0].mxu0
        %572 = vdwg.mxu0
        %v573 = vpack.c.bf16 %v450, %v447
        %v574 = vpack.c.bf16 %v458, %v455
        %v575 = vpack.c.bf16 %v466, %v463
        %v576 = vpack.c.bf16 %v474, %v471
        %v577 = vpack.c.bf16 %v482, %v479
        %v578 = vpack.c.bf16 %v490, %v487
        %v579 = vpack.c.bf16 %v498, %v495
        %v580 = vpack.c.bf16 %v506, %v503
        %v581 = vpack.c.bf16 %v514, %v511
        %v582 = vpack.c.bf16 %v522, %v519
        %v583 = vpack.c.bf16 %v530, %v527
        %v584 = vpack.c.bf16 %v538, %v535
        %v585 = vpack.c.bf16 %v546, %v543
        %v586 = vpack.c.bf16 %v554, %v551
        %v587 = vpack.c.bf16 %v562, %v559
        %v588 = vpack.c.bf16 %v570, %v567
        %v605 = vunpack.c.l.b16 %v573
        %v606 = vunpack.c.h.b16 %v573
        %v607 = vunpack.c.l.b16 %v574
        %v608 = vunpack.c.h.b16 %v574
        %v609 = vunpack.c.l.b16 %v575
        %v610 = vunpack.c.h.b16 %v575
        %v611 = vunpack.c.l.b16 %v576
        %v612 = vunpack.c.h.b16 %v576
        %v613 = vunpack.c.l.b16 %v577
        %v614 = vunpack.c.h.b16 %v577
        %v615 = vunpack.c.l.b16 %v578
        %v616 = vunpack.c.h.b16 %v578
        %v617 = vunpack.c.l.b16 %v579
        %v618 = vunpack.c.h.b16 %v579
        %v619 = vunpack.c.l.b16 %v580
        %v620 = vunpack.c.h.b16 %v580
        %v621 = vunpack.c.l.b16 %v581
        %v622 = vunpack.c.h.b16 %v581
        %v623 = vunpack.c.l.b16 %v582
        %v624 = vunpack.c.h.b16 %v582
        %v625 = vunpack.c.l.b16 %v583
        %v626 = vunpack.c.h.b16 %v583
        %v627 = vunpack.c.l.b16 %v584
        %v628 = vunpack.c.h.b16 %v584
        %v629 = vunpack.c.l.b16 %v585
        %v630 = vunpack.c.h.b16 %v585
        %v631 = vunpack.c.l.b16 %v586
        %v632 = vunpack.c.h.b16 %v586
        %v633 = vunpack.c.l.b16 %v587
        %v634 = vunpack.c.h.b16 %v587
        %v635 = vunpack.c.l.b16 %v588
        %v636 = vunpack.c.h.b16 %v588
        %v637 = vpack.c.b16 %v605, %v605
        %v638 = vpack.c.b16 %v606, %v606
        %v639 = vpack.c.b16 %v607, %v607
        %v640 = vpack.c.b16 %v608, %v608
        %v641 = vpack.c.b16 %v609, %v609
        %v642 = vpack.c.b16 %v610, %v610
        %v643 = vpack.c.b16 %v611, %v611
        %v644 = vpack.c.b16 %v612, %v612
        %v645 = vpack.c.b16 %v613, %v613
        %v646 = vpack.c.b16 %v614, %v614
        %v647 = vpack.c.b16 %v615, %v615
        %v648 = vpack.c.b16 %v616, %v616
        %v649 = vpack.c.b16 %v617, %v617
        %v650 = vpack.c.b16 %v618, %v618
        %v651 = vpack.c.b16 %v619, %v619
        %v652 = vpack.c.b16 %v620, %v620
        %v653 = vpack.c.b16 %v621, %v621
        %v654 = vpack.c.b16 %v622, %v622
        %v655 = vpack.c.b16 %v623, %v623
        %v656 = vpack.c.b16 %v624, %v624
        %v657 = vpack.c.b16 %v625, %v625
        %v658 = vpack.c.b16 %v626, %v626
        %v659 = vpack.c.b16 %v627, %v627
        %v660 = vpack.c.b16 %v628, %v628
        %v661 = vpack.c.b16 %v629, %v629
        %v662 = vpack.c.b16 %v630, %v630
        %v663 = vpack.c.b16 %v631, %v631
        %v664 = vpack.c.b16 %v632, %v632
        %v665 = vpack.c.b16 %v633, %v633
        %v666 = vpack.c.b16 %v634, %v634
        %v667 = vpack.c.b16 %v635, %v635
        %v668 = vpack.c.b16 %v636, %v636
        %701 = vst [vmem:[%s204] sm:$0xf] %v637
        %702 = vst [vmem:[%s204 + $0x4] sm:$0xf] %v638
        %703 = vst [vmem:[%s204 + $0x8] sm:$0xf] %v639
        %704 = vst [vmem:[%s204 + $0xc] sm:$0xf] %v640
        %705 = vst [vmem:[%s204 + $0x10] sm:$0xf] %v641
        %706 = vst [vmem:[%s204 + $0x14] sm:$0xf] %v642
        %707 = vst [vmem:[%s204 + $0x18] sm:$0xf] %v643
        %708 = vst [vmem:[%s204 + $0x1c] sm:$0xf] %v644
        %709 = vst [vmem:[%s204 + $0x20] sm:$0xf] %v645
        %710 = vst [vmem:[%s204 + $0x24] sm:$0xf] %v646
        %711 = vst [vmem:[%s204 + $0x28] sm:$0xf] %v647
        %712 = vst [vmem:[%s204 + $0x2c] sm:$0xf] %v648
        %713 = vst [vmem:[%s204 + $0x30] sm:$0xf] %v649
        %714 = vst [vmem:[%s204 + $0x34] sm:$0xf] %v650
        %715 = vst [vmem:[%s204 + $0x38] sm:$0xf] %v651
        %716 = vst [vmem:[%s204 + $0x3c] sm:$0xf] %v652
        %717 = vst [vmem:[%s204 + $0x40] sm:$0xf] %v653
        %718 = vst [vmem:[%s204 + $0x44] sm:$0xf] %v654
        %719 = vst [vmem:[%s204 + $0x48] sm:$0xf] %v655
        %720 = vst [vmem:[%s204 + $0x4c] sm:$0xf] %v656
        %721 = vst [vmem:[%s204 + $0x50] sm:$0xf] %v657
        %722 = vst [vmem:[%s204 + $0x54] sm:$0xf] %v658
        %723 = vst [vmem:[%s204 + $0x58] sm:$0xf] %v659
        %724 = vst [vmem:[%s204 + $0x5c] sm:$0xf] %v660
        %725 = vst [vmem:[%s204 + $0x60] sm:$0xf] %v661
        %726 = vst [vmem:[%s204 + $0x64] sm:$0xf] %v662
        %727 = vst [vmem:[%s204 + $0x68] sm:$0xf] %v663
        %728 = vst [vmem:[%s204 + $0x6c] sm:$0xf] %v664
        %729 = vst [vmem:[%s204 + $0x70] sm:$0xf] %v665
        %730 = vst [vmem:[%s204 + $0x74] sm:$0xf] %v666
        %731 = vst [vmem:[%s204 + $0x78] sm:$0xf] %v667
        %732 = vst [vmem:[%s204 + $0x7c] sm:$0xf] %v668
        %v733 = vadd.f32 %v447, %v450
        %v734 = vadd.f32 %v733, %v455
        %v735 = vadd.f32 %v734, %v458
        %v736 = vadd.f32 %v735, %v463
        %v737 = vadd.f32 %v736, %v466
        %v738 = vadd.f32 %v737, %v471
        %v739 = vadd.f32 %v738, %v474
        %v740 = vadd.f32 %v739, %v479
        %v741 = vadd.f32 %v740, %v482
        %v742 = vadd.f32 %v741, %v487
        %v743 = vadd.f32 %v742, %v490
        %v744 = vadd.f32 %v743, %v495
        %v745 = vadd.f32 %v744, %v498
        %v746 = vadd.f32 %v745, %v503
        %v747 = vadd.f32 %v746, %v506
        %v748 = vadd.f32 %v747, %v511
        %v749 = vadd.f32 %v748, %v514
        %v750 = vadd.f32 %v749, %v519
        %v751 = vadd.f32 %v750, %v522
        %v752 = vadd.f32 %v751, %v527
        %v753 = vadd.f32 %v752, %v530
        %v754 = vadd.f32 %v753, %v535
        %v755 = vadd.f32 %v754, %v538
        %v756 = vadd.f32 %v755, %v543
        %v757 = vadd.f32 %v756, %v546
        %v758 = vadd.f32 %v757, %v551
        %v759 = vadd.f32 %v758, %v554
        %v760 = vadd.f32 %v759, %v559
        %v761 = vadd.f32 %v760, %v562
        %v762 = vadd.f32 %v761, %v567
        %v763 = vadd.f32 %v762, %v570
        %v764 = vrot.slane %v763, 4
        %v765 = vadd.f32 %v763, %v764
        %v766 = vrot.slane %v765, 2
        %v767 = vadd.f32 %v765, %v766
        %v768 = vrot.slane %v767, 1
        %v769 = vadd.f32 %v767, %v768
        %v770 = vmul.f32 %v769, 0.00390625
        %v771 = vsub.f32 %v447, %v770
        %v772 = vsub.f32 %v450, %v770
        %v773 = vsub.f32 %v455, %v770
        %v774 = vsub.f32 %v458, %v770
        %v775 = vsub.f32 %v463, %v770
        %v776 = vsub.f32 %v466, %v770
        %v777 = vsub.f32 %v471, %v770
        %v778 = vsub.f32 %v474, %v770
        %v779 = vsub.f32 %v479, %v770
        %v780 = vsub.f32 %v482, %v770
        %v781 = vsub.f32 %v487, %v770
        %v782 = vsub.f32 %v490, %v770
        %v783 = vsub.f32 %v495, %v770
        %v784 = vsub.f32 %v498, %v770
        %v785 = vsub.f32 %v503, %v770
        %v786 = vsub.f32 %v506, %v770
        %v787 = vsub.f32 %v511, %v770
        %v788 = vsub.f32 %v514, %v770
        %v789 = vsub.f32 %v519, %v770
        %v790 = vsub.f32 %v522, %v770
        %v791 = vsub.f32 %v527, %v770
        %v792 = vsub.f32 %v530, %v770
        %v793 = vsub.f32 %v535, %v770
        %v794 = vsub.f32 %v538, %v770
        %v795 = vsub.f32 %v543, %v770
        %v796 = vsub.f32 %v546, %v770
        %v797 = vsub.f32 %v551, %v770
        %v798 = vsub.f32 %v554, %v770
        %v799 = vsub.f32 %v559, %v770
        %v800 = vsub.f32 %v562, %v770
        %v801 = vsub.f32 %v567, %v770
        %v802 = vsub.f32 %v570, %v770
        %v803 = vmul.f32 %v771, %v771
        %v804 = vmul.f32 %v772, %v772
        %v805 = vmul.f32 %v773, %v773
        %v806 = vmul.f32 %v774, %v774
        %v807 = vmul.f32 %v775, %v775
        %v808 = vmul.f32 %v776, %v776
        %v809 = vmul.f32 %v777, %v777
        %v810 = vmul.f32 %v778, %v778
        %v811 = vmul.f32 %v779, %v779
        %v812 = vmul.f32 %v780, %v780
        %v813 = vmul.f32 %v781, %v781
        %v814 = vmul.f32 %v782, %v782
        %v815 = vmul.f32 %v783, %v783
        %v816 = vmul.f32 %v784, %v784
        %v817 = vmul.f32 %v785, %v785
        %v818 = vmul.f32 %v786, %v786
        %v819 = vmul.f32 %v787, %v787
        %v820 = vmul.f32 %v788, %v788
        %v821 = vmul.f32 %v789, %v789
        %v822 = vmul.f32 %v790, %v790
        %v823 = vmul.f32 %v791, %v791
        %v824 = vmul.f32 %v792, %v792
        %v825 = vmul.f32 %v793, %v793
        %v826 = vmul.f32 %v794, %v794
        %v827 = vmul.f32 %v795, %v795
        %v828 = vmul.f32 %v796, %v796
        %v829 = vmul.f32 %v797, %v797
        %v830 = vmul.f32 %v798, %v798
        %v831 = vmul.f32 %v799, %v799
        %v832 = vmul.f32 %v800, %v800
        %v833 = vmul.f32 %v801, %v801
        %v834 = vmul.f32 %v802, %v802
        %v835 = vadd.f32 %v803, %v804
        %v836 = vadd.f32 %v835, %v805
        %v837 = vadd.f32 %v836, %v806
        %v838 = vadd.f32 %v837, %v807
        %v839 = vadd.f32 %v838, %v808
        %v840 = vadd.f32 %v839, %v809
        %v841 = vadd.f32 %v840, %v810
        %v842 = vadd.f32 %v841, %v811
        %v843 = vadd.f32 %v842, %v812
        %v844 = vadd.f32 %v843, %v813
        %v845 = vadd.f32 %v844, %v814
        %v846 = vadd.f32 %v845, %v815
        %v847 = vadd.f32 %v846, %v816
        %v848 = vadd.f32 %v847, %v817
        %v849 = vadd.f32 %v848, %v818
        %v850 = vadd.f32 %v849, %v819
        %v851 = vadd.f32 %v850, %v820
        %v852 = vadd.f32 %v851, %v821
        %v853 = vadd.f32 %v852, %v822
        %v854 = vadd.f32 %v853, %v823
        %v855 = vadd.f32 %v854, %v824
        %v856 = vadd.f32 %v855, %v825
        %v857 = vadd.f32 %v856, %v826
        %v858 = vadd.f32 %v857, %v827
        %v859 = vadd.f32 %v858, %v828
        %v860 = vadd.f32 %v859, %v829
        %v861 = vadd.f32 %v860, %v830
        %v862 = vadd.f32 %v861, %v831
        %v863 = vadd.f32 %v862, %v832
        %v864 = vadd.f32 %v863, %v833
        %v865 = vadd.f32 %v864, %v834
        %v866 = vrot.slane %v865, 4
        %v867 = vadd.f32 %v865, %v866
        %v868 = vrot.slane %v867, 2
        %v869 = vadd.f32 %v867, %v868
        %v870 = vrot.slane %v869, 1
        %v871 = vadd.f32 %v869, %v870
        %v872 = vlaneseq
        %vm873 = vcmp.ge.s32.totalorder %v872, 0
        %vm874 = vcmp.lt.s32.totalorder %v872, 128
        %vm875 = vmand %vm873, %vm874
        %876 = vst.msk [vmem:[%s211] sm:$0x1] %vm875, %v769
        %877 = vst.msk [vmem:[%s211 + $0x1] sm:$0x1] %vm875, %v871
        %s878 = sand.u32 %s95, 1
        %s879 = scalar_lea.sflag [#allocation3], %s878
        %s880 = sand.u32 %s95, 1
        %s881 = smul.addr %s880, 128
        %s882 = scalar_lea.vmem [#allocation2], %s881
        %s883 = sand.u32 %s121, 1
        %s884 = scalar_lea.sflag [#allocation5], %s883
        %s885 = sand.u32 %s121, 1
        %s886 = smul.addr %s885, 2
        %s887 = scalar_lea.vmem [#allocation4], %s886
        // Predicated region
        $region29: #{tpu_custom_call.1} parent=27 // pred_check
          %p888 = pneg %p105
        $region30: #{tpu_custom_call.1} parent=27 // pred_check_branch
          %890 = sbr.rel (%p888) target = $region32
        $region31: #{tpu_custom_call.1} parent=27 // pred_region
          %s891 = smul.u32 32, %s25
          %s893 = ssub.s32 2048, 2048
          %894 = vsyncadd %s879, %s893
          %s895 = smul.addr %s891, 64
          %s896 = scalar_lea.hbm %s2, %s895
          %s897 = sshll.u32 %s882, 4
          %s898 = int_to_ptr.vmem [resolvable:$true] %s897
          %903 = dma.vmem_to_hbm [thread:$0]  %s898, 2048, %s896, %s879, 64, 64, 4
        $region32: #{tpu_custom_call.1} parent=27 // pred_fallthru
          _
        // Predicated region
        $region33: #{tpu_custom_call.1} parent=27 // pred_check
          %p904 = pneg %p131
        $region34: #{tpu_custom_call.1} parent=27 // pred_check_branch
          %906 = sbr.rel (%p904) target = $region36
        $region35: #{tpu_custom_call.1} parent=27 // pred_region
          %s908 = ssub.s32 32, 32
          %909 = vsyncadd %s884, %s908
          %s910 = smul.addr %s25, 2
          %s911 = smul.addr %s910, 16
          %s912 = scalar_lea.hbm %s3, %s911
          %s914 = sshll.u32 %s887, 4
          %s915 = int_to_ptr.vmem [resolvable:$true] %s914
          %917 = dma.vmem_to_hbm [thread:$0]  %s915, 32, %s912, %s884
        $region36: #{tpu_custom_call.1} parent=27 // pred_fallthru
          _
      $region28: #{tpu_custom_call.1} parent=5 // pred_fallthru
        _
      %p918 = scmp.le.s32.totalorder 2, %s16
      // Predicated region
      $region37: #{tpu_custom_call.1} parent=5 // pred_check
        %p919 = pneg %p918
      $region38: #{tpu_custom_call.1} parent=5 // pred_check_branch
        %921 = sbr.rel (%p919) target = $region40
      $region39: #{tpu_custom_call.1} parent=5 // pred_region
        %s922 = ssub.s32 %s16, 2
        // Predicated region
        $region41: #{tpu_custom_call.1} parent=39 // pred_check
          %p923 = pneg %p111
        $region42: #{tpu_custom_call.1} parent=39 // pred_check_branch
          %925 = sbr.rel (%p923) target = $region44
        $region43: #{tpu_custom_call.1} parent=39 // pred_region
          %s926 = sand.u32 %s96, 1
          %s927 = scalar_lea.sflag [#allocation3], %s926
          %s928 = sand.u32 %s96, 1
          %s929 = smul.addr %s928, 128
          %s930 = scalar_lea.vmem [#allocation2], %s929
          %931 = dma.done %s927, 2048
        $region44: #{tpu_custom_call.1} parent=39 // pred_fallthru
          _
        // Predicated region
        $region45: #{tpu_custom_call.1} parent=39 // pred_check
          %p932 = pneg %p137
        $region46: #{tpu_custom_call.1} parent=39 // pred_check_branch
          %934 = sbr.rel (%p932) target = $region48
        $region47: #{tpu_custom_call.1} parent=39 // pred_region
          %s935 = sand.u32 %s122, 1
          %s936 = scalar_lea.sflag [#allocation5], %s935
          %s937 = sand.u32 %s122, 1
          %s938 = smul.addr %s937, 2
          %s939 = scalar_lea.vmem [#allocation4], %s938
          %940 = dma.done %s936, 32
        $region48: #{tpu_custom_call.1} parent=39 // pred_fallthru
          _
      $region40: #{tpu_custom_call.1} parent=5 // pred_fallthru
        _
    $region6: #{tpu_custom_call.1} parent=1 // loop_footer
      %s20 = sadd.s32 1, %s16
    $region7: #{tpu_custom_call.1} parent=1 // loop_footer_branch
      %15 = sbr.rel target = $region3
    $region8: #{tpu_custom_call.1} parent=1 // loop_exit
      _
    %941 = vsyncpa [#allocation3], 1
    %s942 = scalar_lea.sflag [#allocation3], 1
    %943 = vsyncpa %s942, 1
    %944 = vsyncpa [#allocation5], 1
    %s945 = scalar_lea.sflag [#allocation5], 1
    %946 = vsyncpa %s945, 1

</llo_original>
